<compile_context>
chip_gen: v6e
topology: v6e:2x2x1
jax: 0.10.0
libtpu: 0.0.40
codegen_flags: <defaults>
</compile_context>

<pallas_src>
import functools

import jax
import jax.numpy as jnp
from jax.experimental import pallas as pl
from jax.experimental.pallas import tpu as pltpu


def gru_cell_kernel(x_ref, h_ref, w_all_ref, u_zr_ref, u_h_ref,
                    b_zr_ref, b_h_ref, o_ref):
    """One batch-tile of the GRU cell with fused gate matmuls."""
    H = o_ref.shape[-1]

    x = x_ref[...]                       # native dtype straight into the MXU
    h = h_ref[...]
    h_f32 = h.astype(jnp.float32)        # only operand used element-wise

    # One MXU push for all three x-projections: (B, 3H) = x @ [W_z|W_r|W_h]
    xw = jnp.dot(x, w_all_ref[...], preferred_element_type=jnp.float32)
    # One MXU push for the z/r hidden projections: (B, 2H) = h @ [U_z|U_r]
    hu = (jnp.dot(h, u_zr_ref[...], preferred_element_type=jnp.float32)
          + b_zr_ref[...])

    # z and r from a single sigmoid over the dense (B, 2H) slab.
    zr = jax.nn.sigmoid(xw[:, :2 * H] + hu)
    z = zr[:, :H]
    r = zr[:, H:]

    # Candidate state: U_h consumes r*h, so it stays a separate matmul.
    rh = (r * h_f32).astype(u_h_ref.dtype)
    h_tilde = jnp.tanh(
        xw[:, 2 * H:]
        + jnp.dot(rh, u_h_ref[...], preferred_element_type=jnp.float32)
        + b_h_ref[...])

    # h_next = (1 - z) * h + z * h_tilde  ==  h + z * (h_tilde - h)
    o_ref[...] = (h_f32 + z * (h_tilde - h_f32)).astype(o_ref.dtype)


def pack_gru_params(params, weight_dtype=None):
    """Pre-pack PyTorch-layout params (weight (out,in), bias (out,)) ONCE.

    Do this outside any per-timestep loop: it removes the per-call transpose
    traffic.  Pass weight_dtype=jnp.bfloat16 to halve weight HBM->VMEM bytes
    on v6e/v7x (f32 accumulation preserves accuracy); biases stay f32.
    """
    H = params["U_z_w"].shape[0]
    cvt = (lambda a: a) if weight_dtype is None else (lambda a: a.astype(weight_dtype))
    w_all = jnp.concatenate(
        [params["W_z"].T, params["W_r"].T, params["W_h"].T], axis=1)      # (I, 3H)
    u_zr = jnp.concatenate(
        [params["U_z_w"].T, params["U_r_w"].T], axis=1)                   # (H, 2H)
    u_h = params["U_h_w"].T                                               # (H, H)
    b_zr = jnp.concatenate(
        [params["U_z_b"], params["U_r_b"]]).reshape(1, 2 * H).astype(jnp.float32)
    b_h = params["U_h_b"].reshape(1, H).astype(jnp.float32)
    return {"W_all": cvt(w_all), "U_zr": cvt(u_zr), "U_h": cvt(u_h),
            "b_zr": b_zr, "b_h": b_h}


@functools.partial(jax.jit, static_argnames=("batch_tile",))
def gru_cell(x, h, packed, *, batch_tile=256):
    """x: (B, input_size), h: (B, hidden_size), packed: from pack_gru_params."""
    B, I = x.shape
    H = h.shape[1]

    # Batch tiling: whole batch in one tile when small, else 256-row tiles
    # (multiple of 8 sublanes).  Weights use a constant index_map so they are
    # DMA'd once and stay VMEM-resident across all batch tiles.
    tb = B if B <= batch_tile else batch_tile
    grid = (pl.cdiv(B, tb),)
    const = lambda b: (0, 0)

    return pl.pallas_call(
        gru_cell_kernel,
        out_shape=jax.ShapeDtypeStruct((B, H), h.dtype),
        grid_spec=pltpu.PrefetchScalarGridSpec(
            num_scalar_prefetch=0,
            grid=grid,
            in_specs=[
                pl.BlockSpec((tb, I), lambda b: (b, 0)),        # x tile
                pl.BlockSpec((tb, H), lambda b: (b, 0)),        # h tile
                pl.BlockSpec((I, 3 * H), const),                # W_all (resident)
                pl.BlockSpec((H, 2 * H), const),                # U_zr  (resident)
                pl.BlockSpec((H, H), const),                    # U_h   (resident)
                pl.BlockSpec((1, 2 * H), const),                # b_zr
                pl.BlockSpec((1, H), const),                    # b_h
            ],
            out_specs=pl.BlockSpec((tb, H), lambda b: (b, 0)),
        ),
        compiler_params=pltpu.CompilerParams(
            # Batch tiles are independent -> megacore batch-split on v7x,
            # harmless no-op on v5e/v6e.
            dimension_semantics=("parallel",)),
    )(x, h, packed["W_all"], packed["U_zr"], packed["U_h"],
      packed["b_zr"], packed["b_h"])


def gru_cell_ref(x, h, params):
    """Pure-JAX reference replicating the PyTorch forward exactly."""
    def lin(inp, w, b=None):
        y = inp @ w.T
        return y if b is None else y + b
    z = jax.nn.sigmoid(lin(x, params["W_z"]) + lin(h, params["U_z_w"], params["U_z_b"]))
    r = jax.nn.sigmoid(lin(x, params["W_r"]) + lin(h, params["U_r_w"], params["U_r_b"]))
    h_tilde = jnp.tanh(lin(x, params["W_h"]) + lin(r * h, params["U_h_w"], params["U_h_b"]))
    return (1.0 - z) * h + z * h_tilde


if __name__ == "__main__":
    batch = 8
    input_size = 16
    hidden_size = 32

    key = jax.random.PRNGKey(0)
    keys = jax.random.split(key, 12)

    x = jax.random.normal(keys[0], (batch, input_size), jnp.float32)
    h = jax.random.normal(keys[1], (batch, hidden_size), jnp.float32)

    # Deterministic parameter init (PyTorch nn.Linear layout: weight (out, in)).
    s_in = 1.0 / jnp.sqrt(input_size)
    s_h = 1.0 / jnp.sqrt(hidden_size)
    params = {
        "W_z": jax.random.uniform(keys[2], (hidden_size, input_size), jnp.float32, -s_in, s_in),
        "U_z_w": jax.random.uniform(keys[3], (hidden_size, hidden_size), jnp.float32, -s_h, s_h),
        "U_z_b": jax.random.uniform(keys[4], (hidden_size,), jnp.float32, -s_h, s_h),
        "W_r": jax.random.uniform(keys[5], (hidden_size, input_size), jnp.float32, -s_in, s_in),
        "U_r_w": jax.random.uniform(keys[6], (hidden_size, hidden_size), jnp.float32, -s_h, s_h),
        "U_r_b": jax.random.uniform(keys[7], (hidden_size,), jnp.float32, -s_h, s_h),
        "W_h": jax.random.uniform(keys[8], (hidden_size, input_size), jnp.float32, -s_in, s_in),
        "U_h_w": jax.random.uniform(keys[9], (hidden_size, hidden_size), jnp.float32, -s_h, s_h),
        "U_h_b": jax.random.uniform(keys[10], (hidden_size,), jnp.float32, -s_h, s_h),
    }

    # Pack once (would be hoisted out of any per-timestep loop in real use).
    packed = pack_gru_params(params)   # pass weight_dtype=jnp.bfloat16 on v6e/v7x

    h_next = jax.block_until_ready(gru_cell(x, h, packed))
    h_ref = jax.block_until_ready(gru_cell_ref(x, h, params))

    assert h_next.shape == (batch, hidden_size)
    assert jnp.allclose(h_next, h_ref, atol=1e-5, rtol=1e-5), "mismatch vs reference"
    print("KERNEL_OK")
</pallas_src>

<mosaic_0001>
module attributes {stable_mosaic.version = 11 : i64} {
  func.func @gru_cell_kernel(%arg0: i32, %arg1: memref<8x16xf32, #tpu.memory_space<vmem>>, %arg2: memref<8x32xf32, #tpu.memory_space<vmem>>, %arg3: memref<16x96xf32, #tpu.memory_space<vmem>>, %arg4: memref<32x64xf32, #tpu.memory_space<vmem>>, %arg5: memref<32x32xf32, #tpu.memory_space<vmem>>, %arg6: memref<1x64xf32, #tpu.memory_space<vmem>>, %arg7: memref<1x32xf32, #tpu.memory_space<vmem>>, %arg8: memref<8x32xf32, #tpu.memory_space<vmem>>) attributes {dimension_semantics = [#tpu.dimension_semantics<parallel>], iteration_bounds = array<i64: 1>, scalar_prefetch = 0 : i64, scratch_operands = 0 : i64, tpu.core_type = #tpu.core_type<tc>, window_params = [{transform_indices = @transform_0, window_bounds = array<i64: 8, 16>}, {transform_indices = @transform_1, window_bounds = array<i64: 8, 32>}, {pipeline_mode = #tpu.pipeline_mode<synchronous>, transform_indices = @transform_2, window_bounds = array<i64: 16, 96>}, {pipeline_mode = #tpu.pipeline_mode<synchronous>, transform_indices = @transform_3, window_bounds = array<i64: 32, 64>}, {pipeline_mode = #tpu.pipeline_mode<synchronous>, transform_indices = @transform_4, window_bounds = array<i64: 32, 32>}, {pipeline_mode = #tpu.pipeline_mode<synchronous>, transform_indices = @transform_5, window_bounds = array<i64: 1, 64>}, {pipeline_mode = #tpu.pipeline_mode<synchronous>, transform_indices = @transform_6, window_bounds = array<i64: 1, 32>}, {transform_indices = @transform_7, window_bounds = array<i64: 8, 32>}]} {
    %c0 = arith.constant 0 : index
    %c0_0 = arith.constant 0 : index
    %0 = vector.load %arg1[%c0, %c0_0] : memref<8x16xf32, #tpu.memory_space<vmem>>, vector<8x16xf32>
    %c0_1 = arith.constant 0 : index
    %c0_2 = arith.constant 0 : index
    %1 = vector.load %arg2[%c0_1, %c0_2] : memref<8x32xf32, #tpu.memory_space<vmem>>, vector<8x32xf32>
    %c0_3 = arith.constant 0 : index
    %c0_4 = arith.constant 0 : index
    %2 = vector.load %arg3[%c0_3, %c0_4] : memref<16x96xf32, #tpu.memory_space<vmem>>, vector<16x96xf32>
    %cst = arith.constant dense<0.000000e+00> : vector<8x96xf32>
    %3 = tpu.matmul %0, %2, %cst {dimension_numbers = #tpu.dot_dimension_numbers<[1], [0], [0], [1], [0, 0, 1, 1], [], []>} : vector<8x16xf32>, vector<16x96xf32>, vector<8x96xf32> -> vector<8x96xf32>
    %c0_5 = arith.constant 0 : index
    %c0_6 = arith.constant 0 : index
    %4 = vector.load %arg4[%c0_5, %c0_6] : memref<32x64xf32, #tpu.memory_space<vmem>>, vector<32x64xf32>
    %cst_7 = arith.constant dense<0.000000e+00> : vector<8x64xf32>
    %5 = tpu.matmul %1, %4, %cst_7 {dimension_numbers = #tpu.dot_dimension_numbers<[1], [0], [0], [1], [0, 0, 1, 1], [], []>} : vector<8x32xf32>, vector<32x64xf32>, vector<8x64xf32> -> vector<8x64xf32>
    %c0_8 = arith.constant 0 : index
    %c0_9 = arith.constant 0 : index
    %6 = vector.load %arg6[%c0_8, %c0_9] : memref<1x64xf32, #tpu.memory_space<vmem>>, vector<1x64xf32>
    %7 = vector.broadcast %6 : vector<1x64xf32> to vector<8x64xf32>
    %8 = arith.addf %5, %7 : vector<8x64xf32>
    %9 = vector.extract_strided_slice %3 {offsets = [0, 0], sizes = [8, 64], strides = [1, 1]} : vector<8x96xf32> to vector<8x64xf32>
    %10 = arith.addf %9, %8 : vector<8x64xf32>
    %11 = arith.negf %10 : vector<8x64xf32>
    %12 = math.exp %11 : vector<8x64xf32>
    %cst_10 = arith.constant 1.000000e+00 : f32
    %13 = vector.broadcast %cst_10 : f32 to vector<8x64xf32>
    %14 = arith.addf %13, %12 : vector<8x64xf32>
    %15 = arith.divf %13, %14 : vector<8x64xf32>
    %16 = vector.extract_strided_slice %15 {offsets = [0, 0], sizes = [8, 32], strides = [1, 1]} : vector<8x64xf32> to vector<8x32xf32>
    %17 = vector.extract_strided_slice %15 {offsets = [0, 32], sizes = [8, 32], strides = [1, 1]} : vector<8x64xf32> to vector<8x32xf32>
    %18 = arith.mulf %17, %1 : vector<8x32xf32>
    %19 = vector.extract_strided_slice %3 {offsets = [0, 64], sizes = [8, 32], strides = [1, 1]} : vector<8x96xf32> to vector<8x32xf32>
    %c0_11 = arith.constant 0 : index
    %c0_12 = arith.constant 0 : index
    %20 = vector.load %arg5[%c0_11, %c0_12] : memref<32x32xf32, #tpu.memory_space<vmem>>, vector<32x32xf32>
    %cst_13 = arith.constant dense<0.000000e+00> : vector<8x32xf32>
    %21 = tpu.matmul %18, %20, %cst_13 {dimension_numbers = #tpu.dot_dimension_numbers<[1], [0], [0], [1], [0, 0, 1, 1], [], []>} : vector<8x32xf32>, vector<32x32xf32>, vector<8x32xf32> -> vector<8x32xf32>
    %22 = arith.addf %19, %21 : vector<8x32xf32>
    %c0_14 = arith.constant 0 : index
    %c0_15 = arith.constant 0 : index
    %23 = vector.load %arg7[%c0_14, %c0_15] : memref<1x32xf32, #tpu.memory_space<vmem>>, vector<1x32xf32>
    %24 = vector.broadcast %23 : vector<1x32xf32> to vector<8x32xf32>
    %25 = arith.addf %22, %24 : vector<8x32xf32>
    %26 = math.tanh %25 : vector<8x32xf32>
    %27 = arith.subf %26, %1 : vector<8x32xf32>
    %28 = arith.mulf %16, %27 : vector<8x32xf32>
    %29 = arith.addf %1, %28 : vector<8x32xf32>
    %c0_16 = arith.constant 0 : index
    %c0_17 = arith.constant 0 : index
    %30 = vector.load %arg8[%c0_16, %c0_17] : memref<8x32xf32, #tpu.memory_space<vmem>>, vector<8x32xf32>
    tpu.vector_store %arg8[%c0_16, %c0_17], %29 {strides = array<i32>} : memref<8x32xf32, #tpu.memory_space<vmem>>, vector<8x32xf32>,
    return
  }
  func.func @transform_0(%arg0: i32) -> (i32, i32) {
    %c0_i32 = arith.constant 0 : i32
    %c0_i32_0 = arith.constant 0 : i32
    return %arg0, %c0_i32 : i32, i32
  }
  func.func @transform_1(%arg0: i32) -> (i32, i32) {
    %c0_i32 = arith.constant 0 : i32
    %c0_i32_0 = arith.constant 0 : i32
    return %arg0, %c0_i32 : i32, i32
  }
  func.func @transform_2(%arg0: i32) -> (i32, i32) {
    %c0_i32 = arith.constant 0 : i32
    %c0_i32_0 = arith.constant 0 : i32
    %c0_i32_1 = arith.constant 0 : i32
    return %c0_i32, %c0_i32_0 : i32, i32
  }
  func.func @transform_3(%arg0: i32) -> (i32, i32) {
    %c0_i32 = arith.constant 0 : i32
    %c0_i32_0 = arith.constant 0 : i32
    %c0_i32_1 = arith.constant 0 : i32
    return %c0_i32, %c0_i32_0 : i32, i32
  }
  func.func @transform_4(%arg0: i32) -> (i32, i32) {
    %c0_i32 = arith.constant 0 : i32
    %c0_i32_0 = arith.constant 0 : i32
    %c0_i32_1 = arith.constant 0 : i32
    return %c0_i32, %c0_i32_0 : i32, i32
  }
  func.func @transform_5(%arg0: i32) -> (i32, i32) {
    %c0_i32 = arith.constant 0 : i32
    %c0_i32_0 = arith.constant 0 : i32
    %c0_i32_1 = arith.constant 0 : i32
    return %c0_i32, %c0_i32_0 : i32, i32
  }
  func.func @transform_6(%arg0: i32) -> (i32, i32) {
    %c0_i32 = arith.constant 0 : i32
    %c0_i32_0 = arith.constant 0 : i32
    %c0_i32_1 = arith.constant 0 : i32
    return %c0_i32, %c0_i32_0 : i32, i32
  }
  func.func @transform_7(%arg0: i32) -> (i32, i32) {
    %c0_i32 = arith.constant 0 : i32
    %c0_i32_0 = arith.constant 0 : i32
    return %arg0, %c0_i32 : i32, i32
  }
}

</mosaic_0001>

<llo_original>
// kernel: gru_cell.1
$region0: #{gru_cell.1}
  #allocation0 [shape = 'u32[]', space=smem, size = 0x4, offset = 0x4, fixed_abs, tag = 'smem constant byte address 0x4 - core index']
  #allocation1 [shape = 'u32[144,128]{1,0:T(1,128)}', space=vmem, size = 0x12000, scoped, tag = 'internal scratch']
  %s0 = inlined_call_operand.hbm [shape: f32[8,16], index: 0, kind: input, shape index: {}]
  %s1 = inlined_call_operand.hbm [shape: f32[8,32], index: 1, kind: input, shape index: {}]
  %s2 = inlined_call_operand.hbm [shape: f32[16,96], index: 2, kind: input, shape index: {}]
  %s3 = inlined_call_operand.hbm [shape: f32[32,64], index: 3, kind: input, shape index: {}]
  %s4 = inlined_call_operand.hbm [shape: f32[32,32], index: 4, kind: input, shape index: {}]
  %s5 = inlined_call_operand.vmem [shape: f32[1,64], index: 5, kind: input, shape index: {}]
  %s6 = inlined_call_operand.vmem [shape: f32[1,32], index: 6, kind: input, shape index: {}]
  %s7 = inlined_call_operand.hbm [shape: f32[8,32], index: 7, kind: output, shape index: {}]
  %s8 = sld [smem:[#allocation0]]
  $region58: #{gru_cell.1} parent=0
    _
  %s10 = ssub.s32 1, %s8
  %s11 = scalar_select 0, %s10, %s8
  $region1: #{gru_cell.1} parent=0
    #allocation2 [shape = 'u8[4096]{0}', space=vmem, size = 0x1000, scoped, tag = 'input window, operand 0, single buffered']
    #allocation3 [shape = 's32[1]{0}', space=sflag, size = 0x4, scoped, tag = 'scoped memory for gru_cell.1']
    #allocation4 [shape = 's32[1]{0}', space=sflag, size = 0x4, scoped, tag = 'scoped memory for gru_cell.1']
    #allocation5 [shape = 'u8[4096]{0}', space=vmem, size = 0x1000, scoped, tag = 'input window, operand 1, single buffered']
    #allocation6 [shape = 's32[1]{0}', space=sflag, size = 0x4, scoped, tag = 'scoped memory for gru_cell.1']
    #allocation7 [shape = 'u8[8192]{0}', space=vmem, size = 0x2000, scoped, tag = 'input window, operand 2, single buffered']
    #allocation8 [shape = 'u8[16384]{0}', space=vmem, size = 0x4000, scoped, tag = 'input window, operand 3, single buffered']
    #allocation9 [shape = 's32[1]{0}', space=sflag, size = 0x4, scoped, tag = 'scoped memory for gru_cell.1']
    #allocation10 [shape = 'u8[16384]{0}', space=vmem, size = 0x4000, scoped, tag = 'input window, operand 4, single buffered']
    #allocation11 [shape = 'u8[4096]{0}', space=vmem, size = 0x1000, scoped, tag = 'output window, operand 0, single buffered']
    %12 = vsyncpa [#allocation3], 0
    %13 = vsyncpa [#allocation6], 0
    %14 = vsyncpa [#allocation9], 0
    %15 = vsyncpa [#allocation4], 0
    // Predicated region
    $region2: #{gru_cell.1} parent=1 // pred_check
      _
    $region3: #{gru_cell.1} parent=1 // pred_check_branch
      %17 = sbr.rel (0) target = $region5
    $region4: #{gru_cell.1} parent=1 // pred_region
      %s19 = ssub.s32 128, 128
      %20 = vsyncadd [#allocation3], %s19
      %s22 = sshll.u32 [#allocation2], 4
      %s23 = int_to_ptr.vmem [resolvable:$true] %s22
      %25 = dma.hbm_to_vmem [thread:$0]  %s0, 128, %s23, [#allocation3]
    $region5: #{gru_cell.1} parent=1 // pred_fallthru
      _
    // Predicated region
    $region6: #{gru_cell.1} parent=1 // pred_check
      _
    $region7: #{gru_cell.1} parent=1 // pred_check_branch
      %27 = sbr.rel (0) target = $region9
    $region8: #{gru_cell.1} parent=1 // pred_region
      %s29 = ssub.s32 128, 128
      %30 = vsyncadd [#allocation6], %s29
      %s32 = sshll.u32 [#allocation5], 4
      %s33 = int_to_ptr.vmem [resolvable:$true] %s32
      %35 = dma.hbm_to_vmem [thread:$0]  %s1, 128, %s33, [#allocation6]
    $region9: #{gru_cell.1} parent=1 // pred_fallthru
      _
    // Predicated region
    $region10: #{gru_cell.1} parent=1 // pred_check
      _
    $region11: #{gru_cell.1} parent=1 // pred_check_branch
      %37 = sbr.rel (0) target = $region13
    $region12: #{gru_cell.1} parent=1 // pred_region
      %s39 = ssub.s32 256, 256
      %40 = vsyncadd [#allocation6], %s39
      %s41 = sshll.u32 [#allocation7], 4
      %s42 = int_to_ptr.vmem [resolvable:$true] %s41
      %47 = dma.hbm_to_vmem [thread:$0]  %s2, 256, %s42, [#allocation6], 128, 128, 8
    $region13: #{gru_cell.1} parent=1 // pred_fallthru
      _
    // Predicated region
    $region14: #{gru_cell.1} parent=1 // pred_check
      _
    $region15: #{gru_cell.1} parent=1 // pred_check_branch
      %49 = sbr.rel (0) target = $region17
    $region16: #{gru_cell.1} parent=1 // pred_region
      %s51 = ssub.s32 512, 512
      %52 = vsyncadd [#allocation9], %s51
      %s53 = sshll.u32 [#allocation8], 4
      %s54 = int_to_ptr.vmem [resolvable:$true] %s53
      %59 = dma.hbm_to_vmem [thread:$0]  %s3, 512, %s54, [#allocation9], 128, 128, 8
    $region17: #{gru_cell.1} parent=1 // pred_fallthru
      _
    // Predicated region
    $region18: #{gru_cell.1} parent=1 // pred_check
      _
    $region19: #{gru_cell.1} parent=1 // pred_check_branch
      %61 = sbr.rel (0) target = $region21
    $region20: #{gru_cell.1} parent=1 // pred_region
      %s63 = ssub.s32 512, 512
      %64 = vsyncadd [#allocation9], %s63
      %s65 = sshll.u32 [#allocation10], 4
      %s66 = int_to_ptr.vmem [resolvable:$true] %s65
      %71 = dma.hbm_to_vmem [thread:$0]  %s4, 512, %s66, [#allocation9], 128, 128, 8
    $region21: #{gru_cell.1} parent=1 // pred_fallthru
      _
    // Predicated region
    $region22: #{gru_cell.1} parent=1 // pred_check
      _
    $region23: #{gru_cell.1} parent=1 // pred_check_branch
      %73 = sbr.rel (0) target = $region25
    $region24: #{gru_cell.1} parent=1 // pred_region
      _
    $region25: #{gru_cell.1} parent=1 // pred_fallthru
      _
    // Predicated region
    $region26: #{gru_cell.1} parent=1 // pred_check
      _
    $region27: #{gru_cell.1} parent=1 // pred_check_branch
      %75 = sbr.rel (0) target = $region29
    $region28: #{gru_cell.1} parent=1 // pred_region
      _
    $region29: #{gru_cell.1} parent=1 // pred_fallthru
      _
    // Predicated region
    $region30: #{gru_cell.1} parent=1 // pred_check
      _
    $region31: #{gru_cell.1} parent=1 // pred_check_branch
      %77 = sbr.rel (0) target = $region33
    $region32: #{gru_cell.1} parent=1 // pred_region
      %78 = dma.done [#allocation3], 128
    $region33: #{gru_cell.1} parent=1 // pred_fallthru
      _
    // Predicated region
    $region34: #{gru_cell.1} parent=1 // pred_check
      _
    $region35: #{gru_cell.1} parent=1 // pred_check_branch
      %80 = sbr.rel (0) target = $region37
    $region36: #{gru_cell.1} parent=1 // pred_region
      %81 = dma.done [#allocation6], 128
    $region37: #{gru_cell.1} parent=1 // pred_fallthru
      _
    // Predicated region
    $region38: #{gru_cell.1} parent=1 // pred_check
      _
    $region39: #{gru_cell.1} parent=1 // pred_check_branch
      %83 = sbr.rel (0) target = $region41
    $region40: #{gru_cell.1} parent=1 // pred_region
      %84 = dma.done [#allocation6], 256
    $region41: #{gru_cell.1} parent=1 // pred_fallthru
      _
    // Predicated region
    $region42: #{gru_cell.1} parent=1 // pred_check
      _
    $region43: #{gru_cell.1} parent=1 // pred_check_branch
      %86 = sbr.rel (0) target = $region45
    $region44: #{gru_cell.1} parent=1 // pred_region
      %87 = dma.done [#allocation9], 512
    $region45: #{gru_cell.1} parent=1 // pred_fallthru
      _
    // Predicated region
    $region46: #{gru_cell.1} parent=1 // pred_check
      _
    $region47: #{gru_cell.1} parent=1 // pred_check_branch
      %89 = sbr.rel (0) target = $region49
    $region48: #{gru_cell.1} parent=1 // pred_region
      %90 = dma.done [#allocation9], 512
    $region49: #{gru_cell.1} parent=1 // pred_fallthru
      _
    %v91 = vld [vmem:[#allocation2] sm:$0xff]
    %v92 = vld [vmem:[#allocation5] sm:$0xff]
    %v93 = vld [vmem:[#allocation7] sm:$0xff]
    %v94 = vld [vmem:[#allocation7 + $0x8] sm:$0xff]
    %vm95 = vcmask 130048
    %v97 = vsel %vm95, %v91, 0
    %99 = vmatprep.subr.mxu0 0.0
    %100 = vmatpush1.msra.mxu0 0.0
    %101 = vmatprep.subr.mxu0 0.0
    %102 = vmatpush1.msra.mxu0 0.0
    %103 = vmatprep.subr.mxu0 0.0
    %104 = vmatpush1.msra.mxu0 0.0
    %105 = vmatprep.subr.mxu0 0.0
    %106 = vmatpush1.msra.mxu0 0.0
    %107 = vmatprep.subr.mxu0 0.0
    %108 = vmatpush1.msra.mxu0 0.0
    %109 = vmatprep.subr.mxu0 0.0
    %110 = vmatpush1.msra.mxu0 0.0
    %111 = vmatprep.subr.mxu0 0.0
    %112 = vmatpush1.msra.mxu0 0.0
    %113 = vmatprep.subr.mxu0 0.0
    %114 = vmatpush1.msra.mxu0 0.0
    %115 = vmatprep.subr.mxu0 0.0
    %116 = vmatpush1.msra.mxu0 0.0
    %117 = vmatprep.subr.mxu0 0.0
    %118 = vmatpush1.msra.mxu0 0.0
    %119 = vmatprep.subr.mxu0 0.0
    %120 = vmatpush1.msra.mxu0 0.0
    %121 = vmatprep.subr.mxu0 0.0
    %122 = vmatpush1.msra.mxu0 0.0
    %123 = vmatprep.subr.mxu0 0.0
    %124 = vmatpush1.msra.mxu0 0.0
    %125 = vmatprep.subr.mxu0 0.0
    %126 = vmatpush1.msra.mxu0 0.0
    %127 = vmatprep.subr.mxu0 0.0
    %128 = vmatpush1.msra.mxu0 %v94
    %129 = vmatprep.subr.mxu0 0.0
    %130 = vmatpush1.msra.mxu0 %v93
    %131 = vmatprep.subr.mxu0 0.0
    %132 = vmatpush2.msra.mxu0 0.0
    %133 = vmatprep.subr.mxu0 0.0
    %134 = vmatpush2.msra.mxu0 0.0
    %135 = vmatprep.subr.mxu0 0.0
    %136 = vmatpush2.msra.mxu0 0.0
    %137 = vmatprep.subr.mxu0 0.0
    %138 = vmatpush2.msra.mxu0 0.0
    %139 = vmatprep.subr.mxu0 0.0
    %140 = vmatpush2.msra.mxu0 0.0
    %141 = vmatprep.subr.mxu0 0.0
    %142 = vmatpush2.msra.mxu0 0.0
    %143 = vmatprep.subr.mxu0 0.0
    %144 = vmatpush2.msra.mxu0 0.0
    %145 = vmatprep.subr.mxu0 0.0
    %146 = vmatpush2.msra.mxu0 0.0
    %147 = vmatprep.subr.mxu0 0.0
    %148 = vmatpush2.msra.mxu0 0.0
    %149 = vmatprep.subr.mxu0 0.0
    %150 = vmatpush2.msra.mxu0 0.0
    %151 = vmatprep.subr.mxu0 0.0
    %152 = vmatpush2.msra.mxu0 0.0
    %153 = vmatprep.subr.mxu0 0.0
    %154 = vmatpush2.msra.mxu0 0.0
    %155 = vmatprep.subr.mxu0 0.0
    %156 = vmatpush2.msra.mxu0 0.0
    %157 = vmatprep.subr.mxu0 0.0
    %158 = vmatpush2.msra.mxu0 0.0
    %159 = vmatprep.subr.mxu0 0.0
    %160 = vmatpush2.msra.mxu0 0.0
    %161 = vmatprep.subr.mxu0 0.0
    %162 = vmatpush2.msra.mxu0 0.0
    %163 = vmatprep.mubr.f32.mxu0 0.0
    %164 = vmatmul.mubr.f32.gmra.mxu0 %v97
    %v165 = vpop.f32.mrf.mxu0
    %v166 = vadd.f32 0.0, %v165
    %v167 = vpop.f32.mrf.mxu0
    %168 = vdwg.mxu0
    %v169 = vld [vmem:[#allocation8] sm:$0xff]
    %v170 = vld [vmem:[#allocation8 + $0x8] sm:$0xff]
    %v171 = vld [vmem:[#allocation8 + $0x10] sm:$0xff]
    %v172 = vld [vmem:[#allocation8 + $0x18] sm:$0xff]
    %v173 = vld [vmem:[%s5] sm:$0x1]
    %v175 = vlaneseq
    %v176 = vshrl.u32 %v175, 7
    %v177 = vsub.s32 0, %v176
    %v178 = vrot.slane %v173, %v177
    %vm180 = vcmask 261120
    %v182 = vsel %vm180, %v92, 0
    %184 = vmatprep.subr.mxu0 0.0
    %185 = vmatpush1.msra.mxu0 0.0
    %186 = vmatprep.subr.mxu0 0.0
    %187 = vmatpush1.msra.mxu0 0.0
    %188 = vmatprep.subr.mxu0 0.0
    %189 = vmatpush1.msra.mxu0 0.0
    %190 = vmatprep.subr.mxu0 0.0
    %191 = vmatpush1.msra.mxu0 0.0
    %192 = vmatprep.subr.mxu0 0.0
    %193 = vmatpush1.msra.mxu0 0.0
    %194 = vmatprep.subr.mxu0 0.0
    %195 = vmatpush1.msra.mxu0 0.0
    %196 = vmatprep.subr.mxu0 0.0
    %197 = vmatpush1.msra.mxu0 0.0
    %198 = vmatprep.subr.mxu0 0.0
    %199 = vmatpush1.msra.mxu0 0.0
    %200 = vmatprep.subr.mxu0 0.0
    %201 = vmatpush1.msra.mxu0 0.0
    %202 = vmatprep.subr.mxu0 0.0
    %203 = vmatpush1.msra.mxu0 0.0
    %204 = vmatprep.subr.mxu0 0.0
    %205 = vmatpush1.msra.mxu0 0.0
    %206 = vmatprep.subr.mxu0 0.0
    %207 = vmatpush1.msra.mxu0 0.0
    %208 = vmatprep.subr.mxu0 0.0
    %209 = vmatpush1.msra.mxu0 %v172
    %210 = vmatprep.subr.mxu0 0.0
    %211 = vmatpush1.msra.mxu0 %v171
    %212 = vmatprep.subr.mxu0 0.0
    %213 = vmatpush1.msra.mxu0 %v170
    %214 = vmatprep.subr.mxu0 0.0
    %215 = vmatpush1.msra.mxu0 %v169
    %216 = vmatprep.subr.mxu0 0.0
    %217 = vmatpush2.msra.mxu0 0.0
    %218 = vmatprep.subr.mxu0 0.0
    %219 = vmatpush2.msra.mxu0 0.0
    %220 = vmatprep.subr.mxu0 0.0
    %221 = vmatpush2.msra.mxu0 0.0
    %222 = vmatprep.subr.mxu0 0.0
    %223 = vmatpush2.msra.mxu0 0.0
    %224 = vmatprep.subr.mxu0 0.0
    %225 = vmatpush2.msra.mxu0 0.0
    %226 = vmatprep.subr.mxu0 0.0
    %227 = vmatpush2.msra.mxu0 0.0
    %228 = vmatprep.subr.mxu0 0.0
    %229 = vmatpush2.msra.mxu0 0.0
    %230 = vmatprep.subr.mxu0 0.0
    %231 = vmatpush2.msra.mxu0 0.0
    %232 = vmatprep.subr.mxu0 0.0
    %233 = vmatpush2.msra.mxu0 0.0
    %234 = vmatprep.subr.mxu0 0.0
    %235 = vmatpush2.msra.mxu0 0.0
    %236 = vmatprep.subr.mxu0 0.0
    %237 = vmatpush2.msra.mxu0 0.0
    %238 = vmatprep.subr.mxu0 0.0
    %239 = vmatpush2.msra.mxu0 0.0
    %240 = vmatprep.subr.mxu0 0.0
    %241 = vmatpush2.msra.mxu0 0.0
    %242 = vmatprep.subr.mxu0 0.0
    %243 = vmatpush2.msra.mxu0 0.0
    %244 = vmatprep.subr.mxu0 0.0
    %245 = vmatpush2.msra.mxu0 0.0
    %246 = vmatprep.subr.mxu0 0.0
    %247 = vmatpush2.msra.mxu0 0.0
    %248 = vmatprep.mubr.f32.mxu0 0.0
    %249 = vmatmul.mubr.f32.gmra.mxu0 %v182
    %v250 = vpop.f32.mrf.mxu0
    %v251 = vadd.f32 %v178, %v250
    %v252 = vpop.f32.mrf.mxu0
    %253 = vdwg.mxu0
    %v254 = vadd.f32 %v166, %v251
    %v255 = vxor.u32 %v254, 2147483648
    %v256 = vmul.f32 %v255, 1.442695
    %v257 = vpow.pop %v256
    %v258 = vadd.f32 %v257, 1.0
    %v259 = vrcp.pop %v258
    %v260 = vmul.f32 1.0, %v259
    %261 = vrot.lane.b32.xlu0 %v92, 32
    %v262 = vpop.permute.xlu0 %261
    %v264 = vmul.f32 %v260, %v262
    %v265 = vld [vmem:[#allocation10] sm:$0xff]
    %v266 = vld [vmem:[#allocation10 + $0x8] sm:$0xff]
    %v267 = vld [vmem:[#allocation10 + $0x10] sm:$0xff]
    %v268 = vld [vmem:[#allocation10 + $0x18] sm:$0xff]
    %270 = vrot.lane.b32.xlu0 %v264, 96
    %v271 = vpop.permute.xlu0 %270
    %v272 = vsel %vm180, %v271, 0
    %274 = vmatprep.subr.mxu0 0.0
    %275 = vmatpush1.msra.mxu0 0.0
    %276 = vmatprep.subr.mxu0 0.0
    %277 = vmatpush1.msra.mxu0 0.0
    %278 = vmatprep.subr.mxu0 0.0
    %279 = vmatpush1.msra.mxu0 0.0
    %280 = vmatprep.subr.mxu0 0.0
    %281 = vmatpush1.msra.mxu0 0.0
    %282 = vmatprep.subr.mxu0 0.0
    %283 = vmatpush1.msra.mxu0 0.0
    %284 = vmatprep.subr.mxu0 0.0
    %285 = vmatpush1.msra.mxu0 0.0
    %286 = vmatprep.subr.mxu0 0.0
    %287 = vmatpush1.msra.mxu0 0.0
    %288 = vmatprep.subr.mxu0 0.0
    %289 = vmatpush1.msra.mxu0 0.0
    %290 = vmatprep.subr.mxu0 0.0
    %291 = vmatpush1.msra.mxu0 0.0
    %292 = vmatprep.subr.mxu0 0.0
    %293 = vmatpush1.msra.mxu0 0.0
    %294 = vmatprep.subr.mxu0 0.0
    %295 = vmatpush1.msra.mxu0 0.0
    %296 = vmatprep.subr.mxu0 0.0
    %297 = vmatpush1.msra.mxu0 0.0
    %298 = vmatprep.subr.mxu0 0.0
    %299 = vmatpush1.msra.mxu0 %v268
    %300 = vmatprep.subr.mxu0 0.0
    %301 = vmatpush1.msra.mxu0 %v267
    %302 = vmatprep.subr.mxu0 0.0
    %303 = vmatpush1.msra.mxu0 %v266
    %304 = vmatprep.subr.mxu0 0.0
    %305 = vmatpush1.msra.mxu0 %v265
    %306 = vmatprep.subr.mxu0 0.0
    %307 = vmatpush2.msra.mxu0 0.0
    %308 = vmatprep.subr.mxu0 0.0
    %309 = vmatpush2.msra.mxu0 0.0
    %310 = vmatprep.subr.mxu0 0.0
    %311 = vmatpush2.msra.mxu0 0.0
    %312 = vmatprep.subr.mxu0 0.0
    %313 = vmatpush2.msra.mxu0 0.0
    %314 = vmatprep.subr.mxu0 0.0
    %315 = vmatpush2.msra.mxu0 0.0
    %316 = vmatprep.subr.mxu0 0.0
    %317 = vmatpush2.msra.mxu0 0.0
    %318 = vmatprep.subr.mxu0 0.0
    %319 = vmatpush2.msra.mxu0 0.0
    %320 = vmatprep.subr.mxu0 0.0
    %321 = vmatpush2.msra.mxu0 0.0
    %322 = vmatprep.subr.mxu0 0.0
    %323 = vmatpush2.msra.mxu0 0.0
    %324 = vmatprep.subr.mxu0 0.0
    %325 = vmatpush2.msra.mxu0 0.0
    %326 = vmatprep.subr.mxu0 0.0
    %327 = vmatpush2.msra.mxu0 0.0
    %328 = vmatprep.subr.mxu0 0.0
    %329 = vmatpush2.msra.mxu0 0.0
    %330 = vmatprep.subr.mxu0 0.0
    %331 = vmatpush2.msra.mxu0 0.0
    %332 = vmatprep.subr.mxu0 0.0
    %333 = vmatpush2.msra.mxu0 0.0
    %334 = vmatprep.subr.mxu0 0.0
    %335 = vmatpush2.msra.mxu0 0.0
    %336 = vmatprep.subr.mxu0 0.0
    %337 = vmatpush2.msra.mxu0 0.0
    %338 = vmatprep.mubr.f32.mxu0 0.0
    %339 = vmatmul.mubr.f32.gmra.mxu0 %v272
    %v340 = vpop.f32.mrf.mxu0
    %v341 = vadd.f32 0.0, %v340
    %v342 = vpop.f32.mrf.mxu0
    %343 = vdwg.mxu0
    %345 = vrot.lane.b32.xlu0 %v341, 64
    %v346 = vpop.permute.xlu0 %345
    %v348 = vadd.f32 %v166, %v346
    %v349 = vld [vmem:[%s6] sm:$0x1]
    %v351 = vlaneseq
    %v352 = vshrl.u32 %v351, 7
    %v353 = vsub.s32 0, %v352
    %v354 = vrot.slane %v349, %v353
    %355 = vrot.lane.b32.xlu0 %v354, 64
    %v356 = vpop.permute.xlu0 %355
    %v358 = vadd.f32 %v348, %v356
    %v359 = vtanh.pop %v358
    %360 = vrot.lane.b32.xlu0 %v92, 64
    %v361 = vpop.permute.xlu0 %360
    %v363 = vsub.f32 %v359, %v361
    %365 = vrot.lane.b32.xlu0 %v363, 64
    %v366 = vpop.permute.xlu0 %365
    %v368 = vmul.f32 %v260, %v366
    %v369 = vadd.f32 %v92, %v368
    %370 = vst.msk [vmem:[#allocation11] sm:$0xff] %vm180, %v369
    // Predicated region
    $region50: #{gru_cell.1} parent=1 // pred_check
      _
    $region51: #{gru_cell.1} parent=1 // pred_check_branch
      %372 = sbr.rel (0) target = $region53
    $region52: #{gru_cell.1} parent=1 // pred_region
      %s374 = ssub.s32 128, 128
      %375 = vsyncadd [#allocation4], %s374
      %s377 = sshll.u32 [#allocation11], 4
      %s378 = int_to_ptr.vmem [resolvable:$true] %s377
      %380 = dma.vmem_to_hbm [thread:$0]  %s378, 128, %s7, [#allocation4]
    $region53: #{gru_cell.1} parent=1 // pred_fallthru
      _
    // Predicated region
    $region54: #{gru_cell.1} parent=1 // pred_check
      _
    $region55: #{gru_cell.1} parent=1 // pred_check_branch
      %382 = sbr.rel (0) target = $region57
    $region56: #{gru_cell.1} parent=1 // pred_region
      %383 = dma.done [#allocation4], 128
    $region57: #{gru_cell.1} parent=1 // pred_fallthru
      _
    %384 = vsyncpa [#allocation3], 1
    %385 = vsyncpa [#allocation6], 1
    %386 = vsyncpa [#allocation9], 1
    %387 = vsyncpa [#allocation4], 1

</llo_original>
